<compile_context>
chip_gen: v5e
topology: v5e:2x2
jax: 0.10.0
libtpu: 0.0.40
codegen_flags: <defaults>
</compile_context>

<pallas_src>
import functools
import math

import jax
import jax.numpy as jnp
from jax.experimental import pallas as pl
from jax.experimental.pallas import tpu as pltpu

LANE = 128
SUBLANE = 8


def _round_up(n, m):
    return ((n + m - 1) // m) * m


# --------------------------------------------------------------------------- #
# Kernel
# --------------------------------------------------------------------------- #
def attachment_kernel(styles_ref,                     # SMEM (4,) f32
                      x_ref, h0_ref,                  # (TB, pH) f32
                      wx_ref, bx_ref,                 # (pH, 2pHh+3pH) bf16, (1, .) f32
                      wh_ref, bh_ref,                 # (pH, 3pH) bf16,      (1, .) f32
                      w2_ref, b2_ref, uscale_ref,     # (2pHh, pH) bf16, (1,pH) f32, (1,2pHh) f32
                      out_ref, hnew_ref,              # (TB, pH) f32 outputs
                      *, pH, pHh):
    x = x_ref[...]                                    # f32, kept for x*s0 / z*h0
    h0 = h0_ref[...]
    s0 = styles_ref[0]
    s3 = styles_ref[3]

    xb = x.astype(jnp.bfloat16)                       # bf16 LHS -> single-pass MXU
    hb = h0.astype(jnp.bfloat16)

    # ---- fused x-side matmul: [trust-L1 | emotion-L1 | i_r | i_z | i_n] ----
    yx = jnp.dot(xb, wx_ref[...],
                 preferred_element_type=jnp.float32) + bx_ref[...]
    c2 = 2 * pHh                                      # start of GRU gate blocks
    i_r = yx[:, c2 + 0 * pH: c2 + 1 * pH]             # 128-aligned slices: free
    i_z = yx[:, c2 + 1 * pH: c2 + 2 * pH]
    i_n = yx[:, c2 + 2 * pH: c2 + 3 * pH]

    # ---- fused hidden-side GRU matmul: [h_r | h_z | h_n] ----
    yh = jnp.dot(hb, wh_ref[...],
                 preferred_element_type=jnp.float32) + bh_ref[...]
    h_r = yh[:, 0 * pH: 1 * pH]
    h_z = yh[:, 1 * pH: 2 * pH]
    h_n = yh[:, 2 * pH: 3 * pH]

    # ---- GRU cell (PyTorch gate order r, z, n; b_hn stays inside r*(...)) ----
    r = jax.nn.sigmoid(i_r + h_r)
    z = jax.nn.sigmoid(i_z + h_z)
    n = jnp.tanh(i_n + r * h_n)
    h_new = (1.0 - z) * n + z * h0

    # ---- second layer: styles folded into a precomputed lane-scale + bias ----
    # u = [relu(t1)*s1 | relu(e1)*s2]  -> one matmul gives trust*s1 + emotion*s2
    u = jnp.maximum(yx[:, 0:c2], 0.0) * uscale_ref[...]
    te = jnp.dot(u.astype(jnp.bfloat16), w2_ref[...],
                 preferred_element_type=jnp.float32) + b2_ref[...]

    # ---- attachment-style weighted combination ----
    out = x * s0 + te + h_new * s3
    out_ref[...] = out.astype(out_ref.dtype)
    hnew_ref[...] = h_new.astype(hnew_ref.dtype)


# --------------------------------------------------------------------------- #
# Wrapper
# --------------------------------------------------------------------------- #
def attachment_forward(x, h0, fused):
    """Returns (combined_output, new_hidden_state), both (B, H)."""
    B, H = x.shape
    pH = _round_up(H, LANE)
    pHh = _round_up(H // 2, LANE)

    # Fixed batch tile so the grid pipelines / shards for real batch sizes.
    TB = min(_round_up(B, SUBLANE), 128)
    pB = _round_up(B, TB)
    grid = (pB // TB,)

    # Zero-pad activations to full (sublane, lane) tiles -> unmasked, lane-dense
    # loads/stores inside the kernel.
    xp = jnp.zeros((pB, pH), x.dtype).at[:B, :H].set(x)
    h0p = jnp.zeros((pB, pH), h0.dtype).at[:B, :H].set(h0)

    Nx = fused["wx"].shape[1]
    Nh = fused["wh"].shape[1]

    smem = pl.BlockSpec(memory_space=pltpu.MemorySpace.SMEM)
    row_spec = pl.BlockSpec((TB, pH), lambda i: (i, 0))

    def const(shape):
        # Constant block index across the batch grid -> DMA'd once, stays
        # VMEM-resident; single-buffered since it never changes.
        return pl.BlockSpec(shape, lambda i: (0, 0), pipeline_mode=pl.Buffered(1))

    # Explicit scoped-VMEM budget: bf16 weight slabs (single-buffered) + f32
    # bias/scale rows + double-buffered activation tiles + matmul/elementwise
    # transients + headroom.
    weight_bytes = 2 * (pH * Nx + pH * Nh + 2 * pHh * pH)          # bf16 slabs
    row_bytes = 4 * (Nx + Nh + pH + 2 * pHh)                       # f32 rows
    act_bytes = 2 * 4 * (4 * TB * pH)                              # x,h0,out,hnew x2 bufs
    trans_bytes = 4 * TB * (Nx + Nh + 2 * pHh + 6 * pH)            # yx,yh,u,gates,...
    vmem_limit = int(min(weight_bytes + row_bytes + act_bytes + trans_bytes
                         + (16 << 20), 96 << 20))

    kernel = functools.partial(attachment_kernel, pH=pH, pHh=pHh)

    out_p, hnew_p = pl.pallas_call(
        kernel,
        grid=grid,
        out_shape=(jax.ShapeDtypeStruct((pB, pH), x.dtype),
                   jax.ShapeDtypeStruct((pB, pH), x.dtype)),
        in_specs=[smem,
                  row_spec, row_spec,
                  const((pH, Nx)), const((1, Nx)),
                  const((pH, Nh)), const((1, Nh)),
                  const((2 * pHh, pH)), const((1, pH)), const((1, 2 * pHh))],
        out_specs=(row_spec, row_spec),
        compiler_params=pltpu.CompilerParams(
            dimension_semantics=("parallel",),
            vmem_limit_bytes=vmem_limit),
    )(fused["styles"], xp, h0p,
      fused["wx"], fused["bx"], fused["wh"], fused["bh"],
      fused["w2"], fused["b2"], fused["uscale"])

    return out_p[:B, :H], hnew_p[:B, :H]


# --------------------------------------------------------------------------- #
# Parameter construction (raw params + one-time fused/padded bf16 slabs)
# --------------------------------------------------------------------------- #
def init_params(key, hidden_dim):
    """Deterministic init mirroring the PyTorch module's parameter shapes.
    Weights stored as (in_features, out_features)."""
    H = hidden_dim
    assert H % 2 == 0, "hidden_dim must be even (trust/emotion width is H//2)"
    Hh = H // 2
    ks = jax.random.split(key, 8)

    def lin(k, fan_in, fan_out):
        bound = 1.0 / math.sqrt(fan_in)
        kw, kb = jax.random.split(k)
        w = jax.random.uniform(kw, (fan_in, fan_out), jnp.float32, -bound, bound)
        b = jax.random.uniform(kb, (1, fan_out), jnp.float32, -bound, bound)
        return w, b

    tw1, tb1 = lin(ks[0], H, Hh)
    tw2, tb2 = lin(ks[1], Hh, H)
    ew1, eb1 = lin(ks[2], H, Hh)
    ew2, eb2 = lin(ks[3], Hh, H)

    # GRUCell: torch weight_ih/weight_hh are (3H, H); stored transposed (H, 3H),
    # column blocks ordered [r | z | n].
    bound = 1.0 / math.sqrt(H)
    wih = jax.random.uniform(ks[4], (H, 3 * H), jnp.float32, -bound, bound)
    whh = jax.random.uniform(ks[5], (H, 3 * H), jnp.float32, -bound, bound)
    bih = jax.random.uniform(ks[6], (1, 3 * H), jnp.float32, -bound, bound)
    bhh = jax.random.uniform(ks[7], (1, 3 * H), jnp.float32, -bound, bound)

    styles = jnp.array([0.7, 0.1, 0.1, 0.1], dtype=jnp.float32)

    return dict(styles=styles,
                tw1=tw1, tb1=tb1, tw2=tw2, tb2=tb2,
                ew1=ew1, eb1=eb1, ew2=ew2, eb2=eb2,
                wih=wih, bih=bih, whh=whh, bhh=bhh)


def prepare_fused(params, H):
    """Build fused, 128-lane-block-padded, bf16 weight slabs plus the style
    lane-scale row and fused second-layer bias (done ONCE, outside the kernel)."""
    Hh = H // 2
    pH = _round_up(H, LANE)
    pHh = _round_up(Hh, LANE)

    def pad2(w, rows, cols):
        return jnp.zeros((rows, cols), w.dtype).at[:w.shape[0], :w.shape[1]].set(w)

    def pad1(b, cols):
        return jnp.zeros((1, cols), b.dtype).at[:, :b.shape[1]].set(b)

    wih, whh, bih, bhh = params["wih"], params["whh"], params["bih"], params["bhh"]
    s = params["styles"]

    # x-side fused weight: [tw1 | ew1 | w_ir | w_iz | w_in], each block 128-padded.
    wx = jnp.concatenate([
        pad2(params["tw1"], pH, pHh),
        pad2(params["ew1"], pH, pHh),
        pad2(wih[:, 0:H], pH, pH),
        pad2(wih[:, H:2 * H], pH, pH),
        pad2(wih[:, 2 * H:], pH, pH),
    ], axis=1).astype(jnp.bfloat16)
    bx = jnp.concatenate([
        pad1(params["tb1"], pHh), pad1(params["eb1"], pHh),
        pad1(bih[:, 0:H], pH), pad1(bih[:, H:2 * H], pH), pad1(bih[:, 2 * H:], pH),
    ], axis=1)

    # hidden-side fused GRU weight: [w_hr | w_hz | w_hn]
    wh = jnp.concatenate([
        pad2(whh[:, 0:H], pH, pH),
        pad2(whh[:, H:2 * H], pH, pH),
        pad2(whh[:, 2 * H:], pH, pH),
    ], axis=1).astype(jnp.bfloat16)
    bh = jnp.concatenate([
        pad1(bhh[:, 0:H], pH), pad1(bhh[:, H:2 * H], pH), pad1(bhh[:, 2 * H:], pH),
    ], axis=1)

    # second-layer fused weight: rows [0:Hh]=tw2, rows [pHh:pHh+Hh]=ew2.
    w2 = jnp.zeros((2 * pHh, pH), jnp.float32)
    w2 = w2.at[:Hh, :H].set(params["tw2"])
    w2 = w2.at[pHh:pHh + Hh, :H].set(params["ew2"])
    w2 = w2.astype(jnp.bfloat16)

    # Styles folded into a per-lane scale row for the second-layer LHS and a
    # fused bias row (replaces per-tile iota + where in the kernel).
    uscale = jnp.concatenate([jnp.full((1, pHh), s[1], jnp.float32),
                              jnp.full((1, pHh), s[2], jnp.float32)], axis=1)
    b2 = s[1] * pad1(params["tb2"], pH) + s[2] * pad1(params["eb2"], pH)

    return dict(styles=params["styles"],
                wx=wx, bx=bx, wh=wh, bh=bh, w2=w2,
                b2=b2, uscale=uscale)


# --------------------------------------------------------------------------- #
# Pure-JAX reference (matches the PyTorch forward; weights and matmul LHS are
# bf16-rounded exactly where the kernel casts, accumulation/elementwise in f32)
# --------------------------------------------------------------------------- #
def reference_forward(x, h0, p):
    H = x.shape[-1]
    q = lambda a: a.astype(jnp.bfloat16).astype(jnp.float32)
    xb, hb = q(x), q(h0)
    t1 = jnp.maximum(xb @ q(p["tw1"]) + p["tb1"], 0.0)
    trust = q(t1) @ q(p["tw2"]) + p["tb2"]
    e1 = jnp.maximum(xb @ q(p["ew1"]) + p["eb1"], 0.0)
    emotion = q(e1) @ q(p["ew2"]) + p["eb2"]
    gi = xb @ q(p["wih"]) + p["bih"]
    gh = hb @ q(p["whh"]) + p["bhh"]
    r = jax.nn.sigmoid(gi[:, :H] + gh[:, :H])
    z = jax.nn.sigmoid(gi[:, H:2 * H] + gh[:, H:2 * H])
    n = jnp.tanh(gi[:, 2 * H:] + r * gh[:, 2 * H:])
    h_new = (1.0 - z) * n + z * h0
    s = p["styles"]
    out = x * s[0] + trust * s[1] + emotion * s[2] + h_new * s[3]
    return out, h_new


# --------------------------------------------------------------------------- #
if __name__ == "__main__":
    B, H = 2, 32
    key = jax.random.PRNGKey(0)
    k_x, k_p = jax.random.split(key)

    x = jax.random.normal(k_x, (B, H), dtype=jnp.float32)
    h0 = jnp.zeros((B, H), dtype=jnp.float32)   # first-call hidden state
    params = init_params(k_p, H)
    fused = prepare_fused(params, H)

    out, h_new = attachment_forward(x, h0, fused)
    out = jax.block_until_ready(out)
    h_new = jax.block_until_ready(h_new)

    ref_out, ref_h = reference_forward(x, h0, params)
    assert out.shape == (B, H) and h_new.shape == (B, H)
    assert jnp.allclose(out, ref_out, atol=5e-3, rtol=5e-3), "output mismatch"
    assert jnp.allclose(h_new, ref_h, atol=5e-3, rtol=5e-3), "hidden-state mismatch"

    print("KERNEL_OK")
</pallas_src>

<mosaic_0001>
module attributes {stable_mosaic.version = 11 : i64} {
  func.func @attachment_kernel(%arg0: i32, %arg1: memref<4xf32, #tpu.memory_space<smem>>, %arg2: memref<8x128xf32, #tpu.memory_space<vmem>>, %arg3: memref<8x128xf32, #tpu.memory_space<vmem>>, %arg4: memref<128x640xbf16, #tpu.memory_space<vmem>>, %arg5: memref<1x640xf32, #tpu.memory_space<vmem>>, %arg6: memref<128x384xbf16, #tpu.memory_space<vmem>>, %arg7: memref<1x384xf32, #tpu.memory_space<vmem>>, %arg8: memref<256x128xbf16, #tpu.memory_space<vmem>>, %arg9: memref<1x128xf32, #tpu.memory_space<vmem>>, %arg10: memref<1x256xf32, #tpu.memory_space<vmem>>, %arg11: memref<8x128xf32, #tpu.memory_space<vmem>>, %arg12: memref<8x128xf32, #tpu.memory_space<vmem>>) attributes {dimension_semantics = [#tpu.dimension_semantics<parallel>], iteration_bounds = array<i64: 1>, scalar_prefetch = 0 : i64, scratch_operands = 0 : i64, tpu.core_type = #tpu.core_type<tc>, window_params = [{transform_indices = @transform_0, window_bounds = array<i64: 4>}, {transform_indices = @transform_1, window_bounds = array<i64: 8, 128>}, {transform_indices = @transform_2, window_bounds = array<i64: 8, 128>}, {pipeline_mode = #tpu.pipeline_mode<synchronous>, transform_indices = @transform_3, window_bounds = array<i64: 128, 640>}, {pipeline_mode = #tpu.pipeline_mode<synchronous>, transform_indices = @transform_4, window_bounds = array<i64: 1, 640>}, {pipeline_mode = #tpu.pipeline_mode<synchronous>, transform_indices = @transform_5, window_bounds = array<i64: 128, 384>}, {pipeline_mode = #tpu.pipeline_mode<synchronous>, transform_indices = @transform_6, window_bounds = array<i64: 1, 384>}, {pipeline_mode = #tpu.pipeline_mode<synchronous>, transform_indices = @transform_7, window_bounds = array<i64: 256, 128>}, {pipeline_mode = #tpu.pipeline_mode<synchronous>, transform_indices = @transform_8, window_bounds = array<i64: 1, 128>}, {pipeline_mode = #tpu.pipeline_mode<synchronous>, transform_indices = @transform_9, window_bounds = array<i64: 1, 256>}, {transform_indices = @transform_10, window_bounds = array<i64: 8, 128>}, {transform_indices = @transform_11, window_bounds = array<i64: 8, 128>}]} {
    %c0 = arith.constant 0 : index
    %c0_0 = arith.constant 0 : index
    %0 = vector.load %arg2[%c0, %c0_0] : memref<8x128xf32, #tpu.memory_space<vmem>>, vector<8x128xf32>
    %c0_1 = arith.constant 0 : index
    %c0_2 = arith.constant 0 : index
    %1 = vector.load %arg3[%c0_1, %c0_2] : memref<8x128xf32, #tpu.memory_space<vmem>>, vector<8x128xf32>
    %c0_3 = arith.constant 0 : index
    %2 = memref.load %arg1[%c0_3] : memref<4xf32, #tpu.memory_space<smem>>
    %c3 = arith.constant 3 : index
    %3 = memref.load %arg1[%c3] : memref<4xf32, #tpu.memory_space<smem>>
    %4 = arith.truncf %0 : vector<8x128xf32> to vector<8x128xbf16>
    %5 = arith.truncf %1 : vector<8x128xf32> to vector<8x128xbf16>
    %c0_4 = arith.constant 0 : index
    %c0_5 = arith.constant 0 : index
    %6 = vector.load %arg4[%c0_4, %c0_5] : memref<128x640xbf16, #tpu.memory_space<vmem>>, vector<128x640xbf16>
    %cst = arith.constant dense<0.000000e+00> : vector<8x640xf32>
    %7 = tpu.matmul %4, %6, %cst {dimension_numbers = #tpu.dot_dimension_numbers<[1], [0], [0], [1], [0, 0, 1, 1], [], []>} : vector<8x128xbf16>, vector<128x640xbf16>, vector<8x640xf32> -> vector<8x640xf32>
    %c0_6 = arith.constant 0 : index
    %c0_7 = arith.constant 0 : index
    %8 = vector.load %arg5[%c0_6, %c0_7] : memref<1x640xf32, #tpu.memory_space<vmem>>, vector<1x640xf32>
    %9 = vector.broadcast %8 : vector<1x640xf32> to vector<8x640xf32>
    %10 = arith.addf %7, %9 : vector<8x640xf32>
    %11 = vector.extract_strided_slice %10 {offsets = [0, 256], sizes = [8, 128], strides = [1, 1]} : vector<8x640xf32> to vector<8x128xf32>
    %12 = vector.extract_strided_slice %10 {offsets = [0, 384], sizes = [8, 128], strides = [1, 1]} : vector<8x640xf32> to vector<8x128xf32>
    %13 = vector.extract_strided_slice %10 {offsets = [0, 512], sizes = [8, 128], strides = [1, 1]} : vector<8x640xf32> to vector<8x128xf32>
    %c0_8 = arith.constant 0 : index
    %c0_9 = arith.constant 0 : index
    %14 = vector.load %arg6[%c0_8, %c0_9] : memref<128x384xbf16, #tpu.memory_space<vmem>>, vector<128x384xbf16>
    %cst_10 = arith.constant dense<0.000000e+00> : vector<8x384xf32>
    %15 = tpu.matmul %5, %14, %cst_10 {dimension_numbers = #tpu.dot_dimension_numbers<[1], [0], [0], [1], [0, 0, 1, 1], [], []>} : vector<8x128xbf16>, vector<128x384xbf16>, vector<8x384xf32> -> vector<8x384xf32>
    %c0_11 = arith.constant 0 : index
    %c0_12 = arith.constant 0 : index
    %16 = vector.load %arg7[%c0_11, %c0_12] : memref<1x384xf32, #tpu.memory_space<vmem>>, vector<1x384xf32>
    %17 = vector.broadcast %16 : vector<1x384xf32> to vector<8x384xf32>
    %18 = arith.addf %15, %17 : vector<8x384xf32>
    %19 = vector.extract_strided_slice %18 {offsets = [0, 0], sizes = [8, 128], strides = [1, 1]} : vector<8x384xf32> to vector<8x128xf32>
    %20 = vector.extract_strided_slice %18 {offsets = [0, 128], sizes = [8, 128], strides = [1, 1]} : vector<8x384xf32> to vector<8x128xf32>
    %21 = vector.extract_strided_slice %18 {offsets = [0, 256], sizes = [8, 128], strides = [1, 1]} : vector<8x384xf32> to vector<8x128xf32>
    %22 = arith.addf %11, %19 : vector<8x128xf32>
    %23 = arith.negf %22 : vector<8x128xf32>
    %24 = math.exp %23 : vector<8x128xf32>
    %cst_13 = arith.constant 1.000000e+00 : f32
    %25 = vector.broadcast %cst_13 : f32 to vector<8x128xf32>
    %26 = arith.addf %25, %24 : vector<8x128xf32>
    %27 = arith.divf %25, %26 : vector<8x128xf32>
    %28 = arith.addf %12, %20 : vector<8x128xf32>
    %29 = arith.negf %28 : vector<8x128xf32>
    %30 = math.exp %29 : vector<8x128xf32>
    %cst_14 = arith.constant 1.000000e+00 : f32
    %31 = vector.broadcast %cst_14 : f32 to vector<8x128xf32>
    %32 = arith.addf %31, %30 : vector<8x128xf32>
    %33 = arith.divf %31, %32 : vector<8x128xf32>
    %34 = arith.mulf %27, %21 : vector<8x128xf32>
    %35 = arith.addf %13, %34 : vector<8x128xf32>
    %36 = math.tanh %35 : vector<8x128xf32>
    %cst_15 = arith.constant 1.000000e+00 : f32
    %37 = vector.broadcast %cst_15 : f32 to vector<8x128xf32>
    %38 = arith.subf %37, %33 : vector<8x128xf32>
    %39 = arith.mulf %38, %36 : vector<8x128xf32>
    %40 = arith.mulf %33, %1 : vector<8x128xf32>
    %41 = arith.addf %39, %40 : vector<8x128xf32>
    %42 = vector.extract_strided_slice %10 {offsets = [0, 0], sizes = [8, 256], strides = [1, 1]} : vector<8x640xf32> to vector<8x256xf32>
    %cst_16 = arith.constant 0.000000e+00 : f32
    %43 = vector.broadcast %cst_16 : f32 to vector<8x256xf32>
    %44 = arith.maximumf %42, %43 : vector<8x256xf32>
    %c0_17 = arith.constant 0 : index
    %c0_18 = arith.constant 0 : index
    %45 = vector.load %arg10[%c0_17, %c0_18] : memref<1x256xf32, #tpu.memory_space<vmem>>, vector<1x256xf32>
    %46 = vector.broadcast %45 : vector<1x256xf32> to vector<8x256xf32>
    %47 = arith.mulf %44, %46 : vector<8x256xf32>
    %48 = arith.truncf %47 : vector<8x256xf32> to vector<8x256xbf16>
    %c0_19 = arith.constant 0 : index
    %c0_20 = arith.constant 0 : index
    %49 = vector.load %arg8[%c0_19, %c0_20] : memref<256x128xbf16, #tpu.memory_space<vmem>>, vector<256x128xbf16>
    %cst_21 = arith.constant dense<0.000000e+00> : vector<8x128xf32>
    %50 = tpu.matmul %48, %49, %cst_21 {dimension_numbers = #tpu.dot_dimension_numbers<[1], [0], [0], [1], [0, 0, 1, 1], [], []>} : vector<8x256xbf16>, vector<256x128xbf16>, vector<8x128xf32> -> vector<8x128xf32>
    %c0_22 = arith.constant 0 : index
    %c0_23 = arith.constant 0 : index
    %51 = vector.load %arg9[%c0_22, %c0_23] : memref<1x128xf32, #tpu.memory_space<vmem>>, vector<1x128xf32>
    %52 = vector.broadcast %51 : vector<1x128xf32> to vector<8x128xf32>
    %53 = arith.addf %50, %52 : vector<8x128xf32>
    %54 = vector.broadcast %2 : f32 to vector<8x128xf32>
    %55 = arith.mulf %0, %54 : vector<8x128xf32>
    %56 = arith.addf %55, %53 : vector<8x128xf32>
    %57 = vector.broadcast %3 : f32 to vector<8x128xf32>
    %58 = arith.mulf %41, %57 : vector<8x128xf32>
    %59 = arith.addf %56, %58 : vector<8x128xf32>
    %c0_24 = arith.constant 0 : index
    %c0_25 = arith.constant 0 : index
    %60 = vector.load %arg11[%c0_24, %c0_25] : memref<8x128xf32, #tpu.memory_space<vmem>>, vector<8x128xf32>
    tpu.vector_store %arg11[%c0_24, %c0_25], %59 {strides = array<i32>} : memref<8x128xf32, #tpu.memory_space<vmem>>, vector<8x128xf32>,
    %c0_26 = arith.constant 0 : index
    %c0_27 = arith.constant 0 : index
    %61 = vector.load %arg12[%c0_26, %c0_27] : memref<8x128xf32, #tpu.memory_space<vmem>>, vector<8x128xf32>
    tpu.vector_store %arg12[%c0_26, %c0_27], %41 {strides = array<i32>} : memref<8x128xf32, #tpu.memory_space<vmem>>, vector<8x128xf32>,
    return
  }
  func.func @transform_0(%arg0: i32) -> i32 {
    %c0_i32 = arith.constant 0 : i32
    %c0_i32_0 = arith.constant 0 : i32
    return %c0_i32 : i32
  }
  func.func @transform_1(%arg0: i32) -> (i32, i32) {
    %c0_i32 = arith.constant 0 : i32
    %c0_i32_0 = arith.constant 0 : i32
    return %arg0, %c0_i32 : i32, i32
  }
  func.func @transform_2(%arg0: i32) -> (i32, i32) {
    %c0_i32 = arith.constant 0 : i32
    %c0_i32_0 = arith.constant 0 : i32
    return %arg0, %c0_i32 : i32, i32
  }
  func.func @transform_3(%arg0: i32) -> (i32, i32) {
    %c0_i32 = arith.constant 0 : i32
    %c0_i32_0 = arith.constant 0 : i32
    %c0_i32_1 = arith.constant 0 : i32
    return %c0_i32, %c0_i32_0 : i32, i32
  }
  func.func @transform_4(%arg0: i32) -> (i32, i32) {
    %c0_i32 = arith.constant 0 : i32
    %c0_i32_0 = arith.constant 0 : i32
    %c0_i32_1 = arith.constant 0 : i32
    return %c0_i32, %c0_i32_0 : i32, i32
  }
  func.func @transform_5(%arg0: i32) -> (i32, i32) {
    %c0_i32 = arith.constant 0 : i32
    %c0_i32_0 = arith.constant 0 : i32
    %c0_i32_1 = arith.constant 0 : i32
    return %c0_i32, %c0_i32_0 : i32, i32
  }
  func.func @transform_6(%arg0: i32) -> (i32, i32) {
    %c0_i32 = arith.constant 0 : i32
    %c0_i32_0 = arith.constant 0 : i32
    %c0_i32_1 = arith.constant 0 : i32
    return %c0_i32, %c0_i32_0 : i32, i32
  }
  func.func @transform_7(%arg0: i32) -> (i32, i32) {
    %c0_i32 = arith.constant 0 : i32
    %c0_i32_0 = arith.constant 0 : i32
    %c0_i32_1 = arith.constant 0 : i32
    return %c0_i32, %c0_i32_0 : i32, i32
  }
  func.func @transform_8(%arg0: i32) -> (i32, i32) {
    %c0_i32 = arith.constant 0 : i32
    %c0_i32_0 = arith.constant 0 : i32
    %c0_i32_1 = arith.constant 0 : i32
    return %c0_i32, %c0_i32_0 : i32, i32
  }
  func.func @transform_9(%arg0: i32) -> (i32, i32) {
    %c0_i32 = arith.constant 0 : i32
    %c0_i32_0 = arith.constant 0 : i32
    %c0_i32_1 = arith.constant 0 : i32
    return %c0_i32, %c0_i32_0 : i32, i32
  }
  func.func @transform_10(%arg0: i32) -> (i32, i32) {
    %c0_i32 = arith.constant 0 : i32
    %c0_i32_0 = arith.constant 0 : i32
    return %arg0, %c0_i32 : i32, i32
  }
  func.func @transform_11(%arg0: i32) -> (i32, i32) {
    %c0_i32 = arith.constant 0 : i32
    %c0_i32_0 = arith.constant 0 : i32
    return %arg0, %c0_i32 : i32, i32
  }
}

</mosaic_0001>

<llo_original>
// kernel: tpu_custom_call.1
$region0: #{tpu_custom_call.1}
  #allocation0 [shape = 'u32[]', space=smem, size = 0x4, offset = 0x4, fixed_abs, tag = 'smem constant byte address 0x4 - core index']
  #allocation1 [shape = 'u32[72,128]{1,0:T(1,128)}', space=vmem, size = 0x9000, scoped, tag = 'internal scratch']
  %s0 = inlined_call_operand.hbm [shape: f32[4], index: 0, kind: input, shape index: {}]
  %s1 = inlined_call_operand.hbm [shape: f32[8,128], index: 1, kind: input, shape index: {}]
  %s2 = inlined_call_operand.hbm [shape: f32[8,128], index: 2, kind: input, shape index: {}]
  %s3 = inlined_call_operand.hbm [shape: bf16[128,640], index: 3, kind: input, shape index: {}]
  %s4 = inlined_call_operand.hbm [shape: f32[1,640], index: 4, kind: input, shape index: {}]
  %s5 = inlined_call_operand.hbm [shape: bf16[128,384], index: 5, kind: input, shape index: {}]
  %s6 = inlined_call_operand.vmem [shape: f32[1,384], index: 6, kind: input, shape index: {}]
  %s7 = inlined_call_operand.hbm [shape: bf16[256,128], index: 7, kind: input, shape index: {}]
  %s8 = inlined_call_operand.vmem [shape: f32[1,128], index: 8, kind: input, shape index: {}]
  %s9 = inlined_call_operand.vmem [shape: f32[1,256], index: 9, kind: input, shape index: {}]
  %s10 = inlined_call_operand.hbm [shape: f32[8,128], index: 10, kind: output, shape index: {0}]
  %s11 = inlined_call_operand.hbm [shape: f32[8,128], index: 11, kind: output, shape index: {1}]
  %12 = xla_tuple %s10, %s11
  %s13 = sld [smem:[#allocation0]]
  $region86: #{tpu_custom_call.1} parent=0
    _
  %s15 = ssub.s32 1, %s13
  %s16 = scalar_select 0, %s15, %s13
  $region1: #{tpu_custom_call.1} parent=0
    #allocation2 [shape = 'u8[512]{0}', space=smem, size = 0x200, scoped, tag = 'input window, operand 0, single buffered']
    #allocation3 [shape = 's32[1]{0}', space=sflag, size = 0x4, scoped, tag = 'scoped memory for tpu_custom_call.1']
    #allocation4 [shape = 's32[1]{0}', space=sflag, size = 0x4, scoped, tag = 'scoped memory for tpu_custom_call.1']
    #allocation5 [shape = 's32[1]{0}', space=sflag, size = 0x4, scoped, tag = 'scoped memory for tpu_custom_call.1']
    #allocation6 [shape = 'u8[4096]{0}', space=vmem, size = 0x1000, scoped, tag = 'input window, operand 1, single buffered']
    #allocation7 [shape = 'u8[4096]{0}', space=vmem, size = 0x1000, scoped, tag = 'input window, operand 2, single buffered']
    #allocation8 [shape = 's32[1]{0}', space=sflag, size = 0x4, scoped, tag = 'scoped memory for tpu_custom_call.1']
    #allocation9 [shape = 'u8[163840]{0}', space=vmem, size = 0x28000, scoped, tag = 'input window, operand 3, single buffered']
    #allocation10 [shape = 'u8[2560]{0}', space=vmem, size = 0xc00, scoped, tag = 'input window, operand 4, single buffered']
    #allocation11 [shape = 's32[1]{0}', space=sflag, size = 0x4, scoped, tag = 'scoped memory for tpu_custom_call.1']
    #allocation12 [shape = 'u8[98304]{0}', space=vmem, size = 0x18000, scoped, tag = 'input window, operand 5, single buffered']
    #allocation13 [shape = 'u8[65536]{0}', space=vmem, size = 0x10000, scoped, tag = 'input window, operand 7, single buffered']
    #allocation14 [shape = 's32[1]{0}', space=sflag, size = 0x4, scoped, tag = 'scoped memory for tpu_custom_call.1']
    #allocation15 [shape = 'u8[4096]{0}', space=vmem, size = 0x1000, scoped, tag = 'output window, operand 0, single buffered']
    #allocation16 [shape = 'u8[4096]{0}', space=vmem, size = 0x1000, scoped, tag = 'output window, operand 1, single buffered']
    #allocation17 [shape = 's32[1]{0}', space=sflag, size = 0x4, scoped, tag = 'scoped memory for tpu_custom_call.1']
    %17 = vsyncpa [#allocation5], 0
    %18 = vsyncpa [#allocation3], 0
    %19 = vsyncpa [#allocation8], 0
    %20 = vsyncpa [#allocation11], 0
    %21 = vsyncpa [#allocation14], 0
    %22 = vsyncpa [#allocation4], 0
    %23 = vsyncpa [#allocation17], 0
    // Predicated region
    $region2: #{tpu_custom_call.1} parent=1 // pred_check
      _
    $region3: #{tpu_custom_call.1} parent=1 // pred_check_branch
      %25 = sbr.rel (0) target = $region5
    $region4: #{tpu_custom_call.1} parent=1 // pred_region
      %27 = vsyncadd [#allocation5], 0
      %s29 = sshll.u32 %s0, 4
      %s30 = int_to_ptr.hbm [resolvable:$true] %s29
      %32 = dma.hbm_to_smem %s30, 16, [#allocation2], [#allocation5]
    $region5: #{tpu_custom_call.1} parent=1 // pred_fallthru
      _
    // Predicated region
    $region6: #{tpu_custom_call.1} parent=1 // pred_check
      _
    $region7: #{tpu_custom_call.1} parent=1 // pred_check_branch
      %34 = sbr.rel (0) target = $region9
    $region8: #{tpu_custom_call.1} parent=1 // pred_region
      %36 = vsyncadd [#allocation3], 0
      %s38 = sshll.u32 %s1, 4
      %s39 = int_to_ptr.hbm [resolvable:$true] %s38
      %s40 = sshll.u32 [#allocation6], 4
      %s41 = int_to_ptr.vmem [resolvable:$true] %s40
      %43 = dma.hbm_to_vmem [thread:$0]  %s39, 128, %s41, [#allocation3]
    $region9: #{tpu_custom_call.1} parent=1 // pred_fallthru
      _
    // Predicated region
    $region10: #{tpu_custom_call.1} parent=1 // pred_check
      _
    $region11: #{tpu_custom_call.1} parent=1 // pred_check_branch
      %45 = sbr.rel (0) target = $region13
    $region12: #{tpu_custom_call.1} parent=1 // pred_region
      %47 = vsyncadd [#allocation8], 0
      %s49 = sshll.u32 %s2, 4
      %s50 = int_to_ptr.hbm [resolvable:$true] %s49
      %s51 = sshll.u32 [#allocation7], 4
      %s52 = int_to_ptr.vmem [resolvable:$true] %s51
      %54 = dma.hbm_to_vmem [thread:$0]  %s50, 128, %s52, [#allocation8]
    $region13: #{tpu_custom_call.1} parent=1 // pred_fallthru
      _
    // Predicated region
    $region14: #{tpu_custom_call.1} parent=1 // pred_check
      _
    $region15: #{tpu_custom_call.1} parent=1 // pred_check_branch
      %56 = sbr.rel (0) target = $region17
    $region16: #{tpu_custom_call.1} parent=1 // pred_region
      %58 = vsyncadd [#allocation8], 0
      %s59 = sshll.u32 %s3, 4
      %s60 = int_to_ptr.hbm [resolvable:$true] %s59
      %s61 = sshll.u32 [#allocation9], 4
      %s62 = int_to_ptr.vmem [resolvable:$true] %s61
      %67 = dma.hbm_to_vmem [thread:$0]  %s60, 5120, %s62, [#allocation8], 320, 320, 20
    $region17: #{tpu_custom_call.1} parent=1 // pred_fallthru
      _
    // Predicated region
    $region18: #{tpu_custom_call.1} parent=1 // pred_check
      _
    $region19: #{tpu_custom_call.1} parent=1 // pred_check_branch
      %69 = sbr.rel (0) target = $region21
    $region20: #{tpu_custom_call.1} parent=1 // pred_region
      %71 = vsyncadd [#allocation11], 0
      %s73 = sshll.u32 %s4, 4
      %s74 = int_to_ptr.hbm [resolvable:$true] %s73
      %s75 = sshll.u32 [#allocation10], 4
      %s76 = int_to_ptr.vmem [resolvable:$true] %s75
      %78 = dma.hbm_to_vmem [thread:$0]  %s74, 80, %s76, [#allocation11]
    $region21: #{tpu_custom_call.1} parent=1 // pred_fallthru
      _
    // Predicated region
    $region22: #{tpu_custom_call.1} parent=1 // pred_check
      _
    $region23: #{tpu_custom_call.1} parent=1 // pred_check_branch
      %80 = sbr.rel (0) target = $region25
    $region24: #{tpu_custom_call.1} parent=1 // pred_region
      %82 = vsyncadd [#allocation11], 0
      %s83 = sshll.u32 %s5, 4
      %s84 = int_to_ptr.hbm [resolvable:$true] %s83
      %s85 = sshll.u32 [#allocation12], 4
      %s86 = int_to_ptr.vmem [resolvable:$true] %s85
      %91 = dma.hbm_to_vmem [thread:$0]  %s84, 3072, %s86, [#allocation11], 192, 192, 12
    $region25: #{tpu_custom_call.1} parent=1 // pred_fallthru
      _
    // Predicated region
    $region26: #{tpu_custom_call.1} parent=1 // pred_check
      _
    $region27: #{tpu_custom_call.1} parent=1 // pred_check_branch
      %93 = sbr.rel (0) target = $region29
    $region28: #{tpu_custom_call.1} parent=1 // pred_region
      _
    $region29: #{tpu_custom_call.1} parent=1 // pred_fallthru
      _
    // Predicated region
    $region30: #{tpu_custom_call.1} parent=1 // pred_check
      _
    $region31: #{tpu_custom_call.1} parent=1 // pred_check_branch
      %95 = sbr.rel (0) target = $region33
    $region32: #{tpu_custom_call.1} parent=1 // pred_region
      %97 = vsyncadd [#allocation14], 0
      %s98 = sshll.u32 %s7, 4
      %s99 = int_to_ptr.hbm [resolvable:$true] %s98
      %s100 = sshll.u32 [#allocation13], 4
      %s101 = int_to_ptr.vmem [resolvable:$true] %s100
      %106 = dma.hbm_to_vmem [thread:$0]  %s99, 2048, %s101, [#allocation14], 64, 64, 4
    $region33: #{tpu_custom_call.1} parent=1 // pred_fallthru
      _
    // Predicated region
    $region34: #{tpu_custom_call.1} parent=1 // pred_check
      _
    $region35: #{tpu_custom_call.1} parent=1 // pred_check_branch
      %108 = sbr.rel (0) target = $region37
    $region36: #{tpu_custom_call.1} parent=1 // pred_region
      _
    $region37: #{tpu_custom_call.1} parent=1 // pred_fallthru
      _
    // Predicated region
    $region38: #{tpu_custom_call.1} parent=1 // pred_check
      _
    $region39: #{tpu_custom_call.1} parent=1 // pred_check_branch
      %110 = sbr.rel (0) target = $region41
    $region40: #{tpu_custom_call.1} parent=1 // pred_region
      _
    $region41: #{tpu_custom_call.1} parent=1 // pred_fallthru
      _
    // Predicated region
    $region42: #{tpu_custom_call.1} parent=1 // pred_check
      _
    $region43: #{tpu_custom_call.1} parent=1 // pred_check_branch
      %112 = sbr.rel (0) target = $region45
    $region44: #{tpu_custom_call.1} parent=1 // pred_region
      %114 = dma.done [#allocation5], 16
    $region45: #{tpu_custom_call.1} parent=1 // pred_fallthru
      _
    // Predicated region
    $region46: #{tpu_custom_call.1} parent=1 // pred_check
      _
    $region47: #{tpu_custom_call.1} parent=1 // pred_check_branch
      %116 = sbr.rel (0) target = $region49
    $region48: #{tpu_custom_call.1} parent=1 // pred_region
      %118 = dma.done [#allocation3], 128
    $region49: #{tpu_custom_call.1} parent=1 // pred_fallthru
      _
    // Predicated region
    $region50: #{tpu_custom_call.1} parent=1 // pred_check
      _
    $region51: #{tpu_custom_call.1} parent=1 // pred_check_branch
      %120 = sbr.rel (0) target = $region53
    $region52: #{tpu_custom_call.1} parent=1 // pred_region
      %122 = dma.done [#allocation8], 128
    $region53: #{tpu_custom_call.1} parent=1 // pred_fallthru
      _
    // Predicated region
    $region54: #{tpu_custom_call.1} parent=1 // pred_check
      _
    $region55: #{tpu_custom_call.1} parent=1 // pred_check_branch
      %124 = sbr.rel (0) target = $region57
    $region56: #{tpu_custom_call.1} parent=1 // pred_region
      %126 = dma.done [#allocation8], 5120
    $region57: #{tpu_custom_call.1} parent=1 // pred_fallthru
      _
    // Predicated region
    $region58: #{tpu_custom_call.1} parent=1 // pred_check
      _
    $region59: #{tpu_custom_call.1} parent=1 // pred_check_branch
      %128 = sbr.rel (0) target = $region61
    $region60: #{tpu_custom_call.1} parent=1 // pred_region
      %130 = dma.done [#allocation11], 80
    $region61: #{tpu_custom_call.1} parent=1 // pred_fallthru
      _
    // Predicated region
    $region62: #{tpu_custom_call.1} parent=1 // pred_check
      _
    $region63: #{tpu_custom_call.1} parent=1 // pred_check_branch
      %132 = sbr.rel (0) target = $region65
    $region64: #{tpu_custom_call.1} parent=1 // pred_region
      %134 = dma.done [#allocation11], 3072
    $region65: #{tpu_custom_call.1} parent=1 // pred_fallthru
      _
    // Predicated region
    $region66: #{tpu_custom_call.1} parent=1 // pred_check
      _
    $region67: #{tpu_custom_call.1} parent=1 // pred_check_branch
      %136 = sbr.rel (0) target = $region69
    $region68: #{tpu_custom_call.1} parent=1 // pred_region
      %138 = dma.done [#allocation14], 2048
    $region69: #{tpu_custom_call.1} parent=1 // pred_fallthru
      _
    %139 = sfence
    %v140 = vld [vmem:[#allocation6] sm:$0xff]
    %v141 = vld [vmem:[#allocation7] sm:$0xff]
    %s142 = sld [smem:[#allocation2]]
    %s143 = sld [smem:[#allocation2 + $0x3]]
    %v144 = vpack.c.bf16 %v140, %v140
    %v145 = vpack.c.bf16 %v141, %v141
    %v146 = vld [vmem:[#allocation9] sm:$0xff]
    %v147 = vld [vmem:[#allocation9 + $0x8] sm:$0xff]
    %v148 = vld [vmem:[#allocation9 + $0x10] sm:$0xf]
    %v149 = vld [vmem:[#allocation9 + $0x14] sm:$0xff]
    %v150 = vld [vmem:[#allocation9 + $0x1c] sm:$0xff]
    %v151 = vld [vmem:[#allocation9 + $0x24] sm:$0xf]
    %v152 = vld [vmem:[#allocation9 + $0x28] sm:$0xff]
    %v153 = vld [vmem:[#allocation9 + $0x30] sm:$0xff]
    %v154 = vld [vmem:[#allocation9 + $0x38] sm:$0xf]
    %v155 = vld [vmem:[#allocation9 + $0x3c] sm:$0xff]
    %v156 = vld [vmem:[#allocation9 + $0x44] sm:$0xff]
    %v157 = vld [vmem:[#allocation9 + $0x4c] sm:$0xf]
    %v158 = vld [vmem:[#allocation9 + $0x50] sm:$0xff]
    %v159 = vld [vmem:[#allocation9 + $0x58] sm:$0xff]
    %v160 = vld [vmem:[#allocation9 + $0x60] sm:$0xf]
    %v161 = vld [vmem:[#allocation9 + $0x64] sm:$0xff]
    %v162 = vld [vmem:[#allocation9 + $0x6c] sm:$0xff]
    %v163 = vld [vmem:[#allocation9 + $0x74] sm:$0xf]
    %v164 = vld [vmem:[#allocation9 + $0x78] sm:$0xff]
    %v165 = vld [vmem:[#allocation9 + $0x80] sm:$0xff]
    %v166 = vld [vmem:[#allocation9 + $0x88] sm:$0xf]
    %v167 = vld [vmem:[#allocation9 + $0x8c] sm:$0xff]
    %v168 = vld [vmem:[#allocation9 + $0x94] sm:$0xff]
    %v169 = vld [vmem:[#allocation9 + $0x9c] sm:$0xf]
    %v170 = vld [vmem:[#allocation9 + $0xa0] sm:$0xff]
    %v171 = vld [vmem:[#allocation9 + $0xa8] sm:$0xff]
    %v172 = vld [vmem:[#allocation9 + $0xb0] sm:$0xf]
    %v173 = vld [vmem:[#allocation9 + $0xb4] sm:$0xff]
    %v174 = vld [vmem:[#allocation9 + $0xbc] sm:$0xff]
    %v175 = vld [vmem:[#allocation9 + $0xc4] sm:$0xf]
    %v176 = vld [vmem:[#allocation9 + $0xc8] sm:$0xff]
    %v177 = vld [vmem:[#allocation9 + $0xd0] sm:$0xff]
    %v178 = vld [vmem:[#allocation9 + $0xd8] sm:$0xf]
    %v179 = vld [vmem:[#allocation9 + $0xdc] sm:$0xff]
    %v180 = vld [vmem:[#allocation9 + $0xe4] sm:$0xff]
    %v181 = vld [vmem:[#allocation9 + $0xec] sm:$0xf]
    %v182 = vld [vmem:[#allocation9 + $0xf0] sm:$0xff]
    %v183 = vld [vmem:[#allocation9 + $0xf8] sm:$0xff]
    %v184 = vld [vmem:[#allocation9 + $0x100] sm:$0xf]
    %v185 = vld [vmem:[#allocation9 + $0x104] sm:$0xff]
    %v186 = vld [vmem:[#allocation9 + $0x10c] sm:$0xff]
    %v187 = vld [vmem:[#allocation9 + $0x114] sm:$0xf]
    %v188 = vld [vmem:[#allocation9 + $0x118] sm:$0xff]
    %v189 = vld [vmem:[#allocation9 + $0x120] sm:$0xff]
    %v190 = vld [vmem:[#allocation9 + $0x128] sm:$0xf]
    %v191 = vld [vmem:[#allocation9 + $0x12c] sm:$0xff]
    %v192 = vld [vmem:[#allocation9 + $0x134] sm:$0xff]
    %v193 = vld [vmem:[#allocation9 + $0x13c] sm:$0xf]
    %v194 = vld [vmem:[#allocation10] sm:$0x1f]
    %v196 = vperm.slane %v194, 0
    %v197 = vperm.slane %v194, 1
    %v198 = vperm.slane %v194, 2
    %v199 = vperm.slane %v194, 3
    %v200 = vperm.slane %v194, 4
    %v254 = vunpack.c.l.b16 %v146
    %v255 = vunpack.c.h.b16 %v146
    %v256 = vunpack.c.l.b16 %v147
    %v257 = vunpack.c.h.b16 %v147
    %v258 = vunpack.c.l.b16 %v148
    %v259 = vunpack.c.l.b16 %v149
    %v260 = vunpack.c.h.b16 %v149
    %v261 = vunpack.c.l.b16 %v150
    %v262 = vunpack.c.h.b16 %v150
    %v263 = vunpack.c.l.b16 %v151
    %v264 = vunpack.c.l.b16 %v152
    %v265 = vunpack.c.h.b16 %v152
    %v266 = vunpack.c.l.b16 %v153
    %v267 = vunpack.c.h.b16 %v153
    %v268 = vunpack.c.l.b16 %v154
    %v269 = vunpack.c.l.b16 %v155
    %v270 = vunpack.c.h.b16 %v155
    %v271 = vunpack.c.l.b16 %v156
    %v272 = vunpack.c.h.b16 %v156
    %v273 = vunpack.c.l.b16 %v157
    %v274 = vunpack.c.l.b16 %v158
    %v275 = vunpack.c.h.b16 %v158
    %v276 = vunpack.c.l.b16 %v159
    %v277 = vunpack.c.h.b16 %v159
    %v278 = vunpack.c.l.b16 %v160
    %v279 = vunpack.c.l.b16 %v161
    %v280 = vunpack.c.h.b16 %v161
    %v281 = vunpack.c.l.b16 %v162
    %v282 = vunpack.c.h.b16 %v162
    %v283 = vunpack.c.l.b16 %v163
    %v284 = vunpack.c.l.b16 %v164
    %v285 = vunpack.c.h.b16 %v164
    %v286 = vunpack.c.l.b16 %v165
    %v287 = vunpack.c.h.b16 %v165
    %v288 = vunpack.c.l.b16 %v166
    %v289 = vunpack.c.l.b16 %v167
    %v290 = vunpack.c.h.b16 %v167
    %v291 = vunpack.c.l.b16 %v168
    %v292 = vunpack.c.h.b16 %v168
    %v293 = vunpack.c.l.b16 %v169
    %v294 = vunpack.c.l.b16 %v170
    %v295 = vunpack.c.h.b16 %v170
    %v296 = vunpack.c.l.b16 %v171
    %v297 = vunpack.c.h.b16 %v171
    %v298 = vunpack.c.l.b16 %v172
    %v299 = vunpack.c.l.b16 %v173
    %v300 = vunpack.c.h.b16 %v173
    %v301 = vunpack.c.l.b16 %v174
    %v302 = vunpack.c.h.b16 %v174
    %v303 = vunpack.c.l.b16 %v175
    %v304 = vunpack.c.l.b16 %v176
    %v305 = vunpack.c.h.b16 %v176
    %v306 = vunpack.c.l.b16 %v177
    %v307 = vunpack.c.h.b16 %v177
    %v308 = vunpack.c.l.b16 %v178
    %v309 = vunpack.c.l.b16 %v179
    %v310 = vunpack.c.h.b16 %v179
    %v311 = vunpack.c.l.b16 %v180
    %v312 = vunpack.c.h.b16 %v180
    %v313 = vunpack.c.l.b16 %v181
    %v314 = vunpack.c.l.b16 %v182
    %v315 = vunpack.c.h.b16 %v182
    %v316 = vunpack.c.l.b16 %v183
    %v317 = vunpack.c.h.b16 %v183
    %v318 = vunpack.c.l.b16 %v184
    %v319 = vunpack.c.l.b16 %v185
    %v320 = vunpack.c.h.b16 %v185
    %v321 = vunpack.c.l.b16 %v186
    %v322 = vunpack.c.h.b16 %v186
    %v323 = vunpack.c.l.b16 %v187
    %v324 = vunpack.c.l.b16 %v188
    %v325 = vunpack.c.h.b16 %v188
    %v326 = vunpack.c.l.b16 %v189
    %v327 = vunpack.c.h.b16 %v189
    %v328 = vunpack.c.l.b16 %v190
    %v329 = vunpack.c.l.b16 %v191
    %v330 = vunpack.c.h.b16 %v191
    %v331 = vunpack.c.l.b16 %v192
    %v332 = vunpack.c.h.b16 %v192
    %v333 = vunpack.c.l.b16 %v193
    %v334 = vpack.c.b16 %v259, %v254
    %v335 = vpack.c.b16 %v260, %v255
    %v336 = vpack.c.b16 %v261, %v256
    %v337 = vpack.c.b16 %v262, %v257
    %v338 = vpack.c.b16 %v263, %v258
    %v339 = vpack.c.b16 %v269, %v264
    %v340 = vpack.c.b16 %v270, %v265
    %v341 = vpack.c.b16 %v271, %v266
    %v342 = vpack.c.b16 %v272, %v267
    %v343 = vpack.c.b16 %v273, %v268
    %v344 = vpack.c.b16 %v279, %v274
    %v345 = vpack.c.b16 %v280, %v275
    %v346 = vpack.c.b16 %v281, %v276
    %v347 = vpack.c.b16 %v282, %v277
    %v348 = vpack.c.b16 %v283, %v278
    %v349 = vpack.c.b16 %v289, %v284
    %v350 = vpack.c.b16 %v290, %v285
    %v351 = vpack.c.b16 %v291, %v286
    %v352 = vpack.c.b16 %v292, %v287
    %v353 = vpack.c.b16 %v293, %v288
    %v354 = vpack.c.b16 %v299, %v294
    %v355 = vpack.c.b16 %v300, %v295
    %v356 = vpack.c.b16 %v301, %v296
    %v357 = vpack.c.b16 %v302, %v297
    %v358 = vpack.c.b16 %v303, %v298
    %v359 = vpack.c.b16 %v309, %v304
    %v360 = vpack.c.b16 %v310, %v305
    %v361 = vpack.c.b16 %v311, %v306
    %v362 = vpack.c.b16 %v312, %v307
    %v363 = vpack.c.b16 %v313, %v308
    %v364 = vpack.c.b16 %v319, %v314
    %v365 = vpack.c.b16 %v320, %v315
    %v366 = vpack.c.b16 %v321, %v316
    %v367 = vpack.c.b16 %v322, %v317
    %v368 = vpack.c.b16 %v323, %v318
    %v369 = vpack.c.b16 %v329, %v324
    %v370 = vpack.c.b16 %v330, %v325
    %v371 = vpack.c.b16 %v331, %v326
    %v372 = vpack.c.b16 %v332, %v327
    %v373 = vpack.c.b16 %v333, %v328
    %414 = vmatpush.bf16.msra.mxu0 %v369
    %415 = vmatpush.bf16.msra.mxu0 %v364
    %416 = vmatpush.bf16.msra.mxu0 %v359
    %417 = vmatpush.bf16.msra.mxu0 %v354
    %418 = vmatpush.bf16.msra.mxu0 %v349
    %419 = vmatpush.bf16.msra.mxu0 %v344
    %420 = vmatpush.bf16.msra.mxu0 %v339
    %421 = vmatpush.bf16.msra.mxu0 %v334
    %422 = vmatmul.bf16.gmra.mxu0 %v144
    %v423 = vpop.f32.mrf.mxu0
    %v424 = vadd.f32 %v196, %v423
    %v425 = vpop.f32.mrf.mxu0
    %426 = vdwg.mxu0
    %427 = vmatpush.bf16.msra.mxu0 %v370
    %428 = vmatpush.bf16.msra.mxu0 %v365
    %429 = vmatpush.bf16.msra.mxu0 %v360
    %430 = vmatpush.bf16.msra.mxu0 %v355
    %431 = vmatpush.bf16.msra.mxu0 %v350
    %432 = vmatpush.bf16.msra.mxu0 %v345
    %433 = vmatpush.bf16.msra.mxu0 %v340
    %434 = vmatpush.bf16.msra.mxu0 %v335
    %435 = vmatmul.bf16.gmra.mxu0 %v144
    %v436 = vpop.f32.mrf.mxu0
    %v437 = vadd.f32 %v197, %v436
    %v438 = vpop.f32.mrf.mxu0
    %439 = vdwg.mxu0
    %440 = vmatpush.bf16.msra.mxu0 %v371
    %441 = vmatpush.bf16.msra.mxu0 %v366
    %442 = vmatpush.bf16.msra.mxu0 %v361
    %443 = vmatpush.bf16.msra.mxu0 %v356
    %444 = vmatpush.bf16.msra.mxu0 %v351
    %445 = vmatpush.bf16.msra.mxu0 %v346
    %446 = vmatpush.bf16.msra.mxu0 %v341
    %447 = vmatpush.bf16.msra.mxu0 %v336
    %448 = vmatmul.bf16.gmra.mxu0 %v144
    %v449 = vpop.f32.mrf.mxu0
    %v450 = vadd.f32 %v198, %v449
    %v451 = vpop.f32.mrf.mxu0
    %452 = vdwg.mxu0
    %453 = vmatpush.bf16.msra.mxu0 %v372
    %454 = vmatpush.bf16.msra.mxu0 %v367
    %455 = vmatpush.bf16.msra.mxu0 %v362
    %456 = vmatpush.bf16.msra.mxu0 %v357
    %457 = vmatpush.bf16.msra.mxu0 %v352
    %458 = vmatpush.bf16.msra.mxu0 %v347
    %459 = vmatpush.bf16.msra.mxu0 %v342
    %460 = vmatpush.bf16.msra.mxu0 %v337
    %461 = vmatmul.bf16.gmra.mxu0 %v144
    %v462 = vpop.f32.mrf.mxu0
    %v463 = vadd.f32 %v199, %v462
    %v464 = vpop.f32.mrf.mxu0
    %465 = vdwg.mxu0
    %466 = vmatpush.bf16.msra.mxu0 %v373
    %467 = vmatpush.bf16.msra.mxu0 %v368
    %468 = vmatpush.bf16.msra.mxu0 %v363
    %469 = vmatpush.bf16.msra.mxu0 %v358
    %470 = vmatpush.bf16.msra.mxu0 %v353
    %471 = vmatpush.bf16.msra.mxu0 %v348
    %472 = vmatpush.bf16.msra.mxu0 %v343
    %473 = vmatpush.bf16.msra.mxu0 %v338
    %474 = vmatmul.bf16.gmra.mxu0 %v144
    %v475 = vpop.f32.mrf.mxu0
    %v476 = vadd.f32 %v200, %v475
    %v477 = vpop.f32.mrf.mxu0
    %478 = vdwg.mxu0
    %v479 = vld [vmem:[#allocation12] sm:$0xff]
    %v480 = vld [vmem:[#allocation12 + $0x8] sm:$0xf]
    %v481 = vld [vmem:[#allocation12 + $0xc] sm:$0xff]
    %v482 = vld [vmem:[#allocation12 + $0x14] sm:$0xf]
    %v483 = vld [vmem:[#allocation12 + $0x18] sm:$0xff]
    %v484 = vld [vmem:[#allocation12 + $0x20] sm:$0xf]
    %v485 = vld [vmem:[#allocation12 + $0x24] sm:$0xff]
    %v486 = vld [vmem:[#allocation12 + $0x2c] sm:$0xf]
    %v487 = vld [vmem:[#allocation12 + $0x30] sm:$0xff]
    %v488 = vld [vmem:[#allocation12 + $0x38] sm:$0xf]
    %v489 = vld [vmem:[#allocation12 + $0x3c] sm:$0xff]
    %v490 = vld [vmem:[#allocation12 + $0x44] sm:$0xf]
    %v491 = vld [vmem:[#allocation12 + $0x48] sm:$0xff]
    %v492 = vld [vmem:[#allocation12 + $0x50] sm:$0xf]
    %v493 = vld [vmem:[#allocation12 + $0x54] sm:$0xff]
    %v494 = vld [vmem:[#allocation12 + $0x5c] sm:$0xf]
    %v495 = vld [vmem:[#allocation12 + $0x60] sm:$0xff]
    %v496 = vld [vmem:[#allocation12 + $0x68] sm:$0xf]
    %v497 = vld [vmem:[#allocation12 + $0x6c] sm:$0xff]
    %v498 = vld [vmem:[#allocation12 + $0x74] sm:$0xf]
    %v499 = vld [vmem:[#allocation12 + $0x78] sm:$0xff]
    %v500 = vld [vmem:[#allocation12 + $0x80] sm:$0xf]
    %v501 = vld [vmem:[#allocation12 + $0x84] sm:$0xff]
    %v502 = vld [vmem:[#allocation12 + $0x8c] sm:$0xf]
    %v503 = vld [vmem:[#allocation12 + $0x90] sm:$0xff]
    %v504 = vld [vmem:[#allocation12 + $0x98] sm:$0xf]
    %v505 = vld [vmem:[#allocation12 + $0x9c] sm:$0xff]
    %v506 = vld [vmem:[#allocation12 + $0xa4] sm:$0xf]
    %v507 = vld [vmem:[#allocation12 + $0xa8] sm:$0xff]
    %v508 = vld [vmem:[#allocation12 + $0xb0] sm:$0xf]
    %v509 = vld [vmem:[#allocation12 + $0xb4] sm:$0xff]
    %v510 = vld [vmem:[#allocation12 + $0xbc] sm:$0xf]
    %v511 = vld [vmem:[%s6] sm:$0x7]
    %v513 = vperm.slane %v511, 0
    %v514 = vperm.slane %v511, 1
    %v515 = vperm.slane %v511, 2
    %v551 = vunpack.c.l.b16 %v479
    %v552 = vunpack.c.h.b16 %v479
    %v553 = vunpack.c.l.b16 %v480
    %v554 = vunpack.c.l.b16 %v481
    %v555 = vunpack.c.h.b16 %v481
    %v556 = vunpack.c.l.b16 %v482
    %v557 = vunpack.c.l.b16 %v483
    %v558 = vunpack.c.h.b16 %v483
    %v559 = vunpack.c.l.b16 %v484
    %v560 = vunpack.c.l.b16 %v485
    %v561 = vunpack.c.h.b16 %v485
    %v562 = vunpack.c.l.b16 %v486
    %v563 = vunpack.c.l.b16 %v487
    %v564 = vunpack.c.h.b16 %v487
    %v565 = vunpack.c.l.b16 %v488
    %v566 = vunpack.c.l.b16 %v489
    %v567 = vunpack.c.h.b16 %v489
    %v568 = vunpack.c.l.b16 %v490
    %v569 = vunpack.c.l.b16 %v491
    %v570 = vunpack.c.h.b16 %v491
    %v571 = vunpack.c.l.b16 %v492
    %v572 = vunpack.c.l.b16 %v493
    %v573 = vunpack.c.h.b16 %v493
    %v574 = vunpack.c.l.b16 %v494
    %v575 = vunpack.c.l.b16 %v495
    %v576 = vunpack.c.h.b16 %v495
    %v577 = vunpack.c.l.b16 %v496
    %v578 = vunpack.c.l.b16 %v497
    %v579 = vunpack.c.h.b16 %v497
    %v580 = vunpack.c.l.b16 %v498
    %v581 = vunpack.c.l.b16 %v499
    %v582 = vunpack.c.h.b16 %v499
    %v583 = vunpack.c.l.b16 %v500
    %v584 = vunpack.c.l.b16 %v501
    %v585 = vunpack.c.h.b16 %v501
    %v586 = vunpack.c.l.b16 %v502
    %v587 = vunpack.c.l.b16 %v503
    %v588 = vunpack.c.h.b16 %v503
    %v589 = vunpack.c.l.b16 %v504
    %v590 = vunpack.c.l.b16 %v505
    %v591 = vunpack.c.h.b16 %v505
    %v592 = vunpack.c.l.b16 %v506
    %v593 = vunpack.c.l.b16 %v507
    %v594 = vunpack.c.h.b16 %v507
    %v595 = vunpack.c.l.b16 %v508
    %v596 = vunpack.c.l.b16 %v509
    %v597 = vunpack.c.h.b16 %v509
    %v598 = vunpack.c.l.b16 %v510
    %v599 = vpack.c.b16 %v554, %v551
    %v600 = vpack.c.b16 %v555, %v552
    %v601 = vpack.c.b16 %v556, %v553
    %v602 = vpack.c.b16 %v560, %v557
    %v603 = vpack.c.b16 %v561, %v558
    %v604 = vpack.c.b16 %v562, %v559
    %v605 = vpack.c.b16 %v566, %v563
    %v606 = vpack.c.b16 %v567, %v564
    %v607 = vpack.c.b16 %v568, %v565
    %v608 = vpack.c.b16 %v572, %v569
    %v609 = vpack.c.b16 %v573, %v570
    %v610 = vpack.c.b16 %v574, %v571
    %v611 = vpack.c.b16 %v578, %v575
    %v612 = vpack.c.b16 %v579, %v576
    %v613 = vpack.c.b16 %v580, %v577
    %v614 = vpack.c.b16 %v584, %v581
    %v615 = vpack.c.b16 %v585, %v582
    %v616 = vpack.c.b16 %v586, %v583
    %v617 = vpack.c.b16 %v590, %v587
    %v618 = vpack.c.b16 %v591, %v588
    %v619 = vpack.c.b16 %v592, %v589
    %v620 = vpack.c.b16 %v596, %v593
    %v621 = vpack.c.b16 %v597, %v594
    %v622 = vpack.c.b16 %v598, %v595
    %647 = vmatpush.bf16.msra.mxu0 %v620
    %648 = vmatpush.bf16.msra.mxu0 %v617
    %649 = vmatpush.bf16.msra.mxu0 %v614
    %650 = vmatpush.bf16.msra.mxu0 %v611
    %651 = vmatpush.bf16.msra.mxu0 %v608
    %652 = vmatpush.bf16.msra.mxu0 %v605
    %653 = vmatpush.bf16.msra.mxu0 %v602
    %654 = vmatpush.bf16.msra.mxu0 %v599
    %655 = vmatmul.bf16.gmra.mxu0 %v145
    %v656 = vpop.f32.mrf.mxu0
    %v657 = vadd.f32 %v513, %v656
    %v658 = vpop.f32.mrf.mxu0
    %659 = vdwg.mxu0
    %660 = vmatpush.bf16.msra.mxu0 %v621
    %661 = vmatpush.bf16.msra.mxu0 %v618
    %662 = vmatpush.bf16.msra.mxu0 %v615
    %663 = vmatpush.bf16.msra.mxu0 %v612
    %664 = vmatpush.bf16.msra.mxu0 %v609
    %665 = vmatpush.bf16.msra.mxu0 %v606
    %666 = vmatpush.bf16.msra.mxu0 %v603
    %667 = vmatpush.bf16.msra.mxu0 %v600
    %668 = vmatmul.bf16.gmra.mxu0 %v145
    %v669 = vpop.f32.mrf.mxu0
    %v670 = vadd.f32 %v514, %v669
    %v671 = vpop.f32.mrf.mxu0
    %672 = vdwg.mxu0
    %673 = vmatpush.bf16.msra.mxu0 %v622
    %674 = vmatpush.bf16.msra.mxu0 %v619
    %675 = vmatpush.bf16.msra.mxu0 %v616
    %676 = vmatpush.bf16.msra.mxu0 %v613
    %677 = vmatpush.bf16.msra.mxu0 %v610
    %678 = vmatpush.bf16.msra.mxu0 %v607
    %679 = vmatpush.bf16.msra.mxu0 %v604
    %680 = vmatpush.bf16.msra.mxu0 %v601
    %681 = vmatmul.bf16.gmra.mxu0 %v145
    %v682 = vpop.f32.mrf.mxu0
    %v683 = vadd.f32 %v515, %v682
    %v684 = vpop.f32.mrf.mxu0
    %685 = vdwg.mxu0
    %v686 = vadd.f32 %v450, %v657
    %v687 = vxor.u32 %v686, 2147483648
    %v688 = vmul.f32 %v687, 1.442695
    %v689 = vpow.pop %v688
    %v690 = vadd.f32 %v689, 1.0
    %v691 = vrcp.pop %v690
    %v692 = vmul.f32 %v690, %v691
    %v693 = vsub.f32 1.0, %v692
    %v694 = vmul.f32 %v691, %v693
    %v695 = vadd.f32 %v691, %v694
    %vm696 = vweird.f32 %v690
    %vm697 = vweird.f32 %v691
    %vm698 = vmor %vm696, %vm697
    %v699 = vsel %vm698, %v691, %v695
    %v700 = vand.u32 2147483647, %v690
    %vm701 = vcmp.eq.f32.partialorder %v700, 8.507059e+37
    %v702 = vand.u32 %v690, 2147483648
    %v703 = vor.u32 1.1754944e-38, %v702
    %v704 = vsel %vm701, %v703, %v699
    %v705 = vmul.f32 1.0, %v704
    %v706 = vadd.f32 %v463, %v670
    %v707 = vxor.u32 %v706, 2147483648
    %v708 = vmul.f32 %v707, 1.442695
    %v709 = vpow.pop %v708
    %v710 = vadd.f32 %v709, 1.0
    %v711 = vrcp.pop %v710
    %v712 = vmul.f32 %v710, %v711
    %v713 = vsub.f32 1.0, %v712
    %v714 = vmul.f32 %v711, %v713
    %v715 = vadd.f32 %v711, %v714
    %vm716 = vweird.f32 %v710
    %vm717 = vweird.f32 %v711
    %vm718 = vmor %vm716, %vm717
    %v719 = vsel %vm718, %v711, %v715
    %v720 = vand.u32 2147483647, %v710
    %vm721 = vcmp.eq.f32.partialorder %v720, 8.507059e+37
    %v722 = vand.u32 %v710, 2147483648
    %v723 = vor.u32 1.1754944e-38, %v722
    %v724 = vsel %vm721, %v723, %v719
    %v725 = vmul.f32 1.0, %v724
    %v726 = vmul.f32 %v705, %v683
    %v727 = vadd.f32 %v476, %v726
    %v728 = vtanh.pop %v727
    %v729 = vsub.f32 1.0, %v725
    %v730 = vmul.f32 %v729, %v728
    %v731 = vmul.f32 %v725, %v141
    %v732 = vadd.f32 %v730, %v731
    %v733 = vmax.f32 %v424, 0.0
    %v734 = vmax.f32 %v437, 0.0
    %v735 = vld [vmem:[%s9] sm:$0x3]
    %v737 = vperm.slane %v735, 0
    %v738 = vperm.slane %v735, 1
    %v741 = vmul.f32 %v733, %v737
    %v742 = vmul.f32 %v734, %v738
    %v743 = vpack.c.bf16 %v741, %v741
    %v744 = vpack.c.bf16 %v742, %v742
    %v745 = vld [vmem:[#allocation13] sm:$0xf]
    %v746 = vld [vmem:[#allocation13 + $0x4] sm:$0xf]
    %v747 = vld [vmem:[#allocation13 + $0x8] sm:$0xf]
    %v748 = vld [vmem:[#allocation13 + $0xc] sm:$0xf]
    %v749 = vld [vmem:[#allocation13 + $0x10] sm:$0xf]
    %v750 = vld [vmem:[#allocation13 + $0x14] sm:$0xf]
    %v751 = vld [vmem:[#allocation13 + $0x18] sm:$0xf]
    %v752 = vld [vmem:[#allocation13 + $0x1c] sm:$0xf]
    %v753 = vld [vmem:[#allocation13 + $0x20] sm:$0xf]
    %v754 = vld [vmem:[#allocation13 + $0x24] sm:$0xf]
    %v755 = vld [vmem:[#allocation13 + $0x28] sm:$0xf]
    %v756 = vld [vmem:[#allocation13 + $0x2c] sm:$0xf]
    %v757 = vld [vmem:[#allocation13 + $0x30] sm:$0xf]
    %v758 = vld [vmem:[#allocation13 + $0x34] sm:$0xf]
    %v759 = vld [vmem:[#allocation13 + $0x38] sm:$0xf]
    %v760 = vld [vmem:[#allocation13 + $0x3c] sm:$0xf]
    %v761 = vld [vmem:[#allocation13 + $0x40] sm:$0xf]
    %v762 = vld [vmem:[#allocation13 + $0x44] sm:$0xf]
    %v763 = vld [vmem:[#allocation13 + $0x48] sm:$0xf]
    %v764 = vld [vmem:[#allocation13 + $0x4c] sm:$0xf]
    %v765 = vld [vmem:[#allocation13 + $0x50] sm:$0xf]
    %v766 = vld [vmem:[#allocation13 + $0x54] sm:$0xf]
    %v767 = vld [vmem:[#allocation13 + $0x58] sm:$0xf]
    %v768 = vld [vmem:[#allocation13 + $0x5c] sm:$0xf]
    %v769 = vld [vmem:[#allocation13 + $0x60] sm:$0xf]
    %v770 = vld [vmem:[#allocation13 + $0x64] sm:$0xf]
    %v771 = vld [vmem:[#allocation13 + $0x68] sm:$0xf]
    %v772 = vld [vmem:[#allocation13 + $0x6c] sm:$0xf]
    %v773 = vld [vmem:[#allocation13 + $0x70] sm:$0xf]
    %v774 = vld [vmem:[#allocation13 + $0x74] sm:$0xf]
    %v775 = vld [vmem:[#allocation13 + $0x78] sm:$0xf]
    %v776 = vld [vmem:[#allocation13 + $0x7c] sm:$0xf]
    %v777 = vld [vmem:[%s8] sm:$0x1]
    %v779 = vperm.slane %v777, 0
    %v813 = vunpack.c.l.b16 %v745
    %v814 = vunpack.c.l.b16 %v746
    %v815 = vunpack.c.l.b16 %v747
    %v816 = vunpack.c.l.b16 %v748
    %v817 = vunpack.c.l.b16 %v749
    %v818 = vunpack.c.l.b16 %v750
    %v819 = vunpack.c.l.b16 %v751
    %v820 = vunpack.c.l.b16 %v752
    %v821 = vunpack.c.l.b16 %v753
    %v822 = vunpack.c.l.b16 %v754
    %v823 = vunpack.c.l.b16 %v755
    %v824 = vunpack.c.l.b16 %v756
    %v825 = vunpack.c.l.b16 %v757
    %v826 = vunpack.c.l.b16 %v758
    %v827 = vunpack.c.l.b16 %v759
    %v828 = vunpack.c.l.b16 %v760
    %v829 = vunpack.c.l.b16 %v761
    %v830 = vunpack.c.l.b16 %v762
    %v831 = vunpack.c.l.b16 %v763
    %v832 = vunpack.c.l.b16 %v764
    %v833 = vunpack.c.l.b16 %v765
    %v834 = vunpack.c.l.b16 %v766
    %v835 = vunpack.c.l.b16 %v767
    %v836 = vunpack.c.l.b16 %v768
    %v837 = vunpack.c.l.b16 %v769
    %v838 = vunpack.c.l.b16 %v770
    %v839 = vunpack.c.l.b16 %v771
    %v840 = vunpack.c.l.b16 %v772
    %v841 = vunpack.c.l.b16 %v773
    %v842 = vunpack.c.l.b16 %v774
    %v843 = vunpack.c.l.b16 %v775
    %v844 = vunpack.c.l.b16 %v776
    %v845 = vpack.c.b16 %v814, %v813
    %v846 = vpack.c.b16 %v816, %v815
    %v847 = vpack.c.b16 %v818, %v817
    %v848 = vpack.c.b16 %v820, %v819
    %v849 = vpack.c.b16 %v822, %v821
    %v850 = vpack.c.b16 %v824, %v823
    %v851 = vpack.c.b16 %v826, %v825
    %v852 = vpack.c.b16 %v828, %v827
    %v853 = vpack.c.b16 %v830, %v829
    %v854 = vpack.c.b16 %v832, %v831
    %v855 = vpack.c.b16 %v834, %v833
    %v856 = vpack.c.b16 %v836, %v835
    %v857 = vpack.c.b16 %v838, %v837
    %v858 = vpack.c.b16 %v840, %v839
    %v859 = vpack.c.b16 %v842, %v841
    %v860 = vpack.c.b16 %v844, %v843
    %877 = vmatpush.bf16.msra.mxu0 %v852
    %878 = vmatpush.bf16.msra.mxu0 %v851
    %879 = vmatpush.bf16.msra.mxu0 %v850
    %880 = vmatpush.bf16.msra.mxu0 %v849
    %881 = vmatpush.bf16.msra.mxu0 %v848
    %882 = vmatpush.bf16.msra.mxu0 %v847
    %883 = vmatpush.bf16.msra.mxu0 %v846
    %884 = vmatpush.bf16.msra.mxu0 %v845
    %885 = vmatmul.bf16.gmra.mxu0 %v743
    %v886 = vpop.f32.mrf.mxu0
    %v887 = vadd.f32 %v779, %v886
    %v888 = vpop.f32.mrf.mxu0
    %889 = vdwg.mxu0
    %890 = vmatpush.bf16.msra.mxu0 %v860
    %891 = vmatpush.bf16.msra.mxu0 %v859
    %892 = vmatpush.bf16.msra.mxu0 %v858
    %893 = vmatpush.bf16.msra.mxu0 %v857
    %894 = vmatpush.bf16.msra.mxu0 %v856
    %895 = vmatpush.bf16.msra.mxu0 %v855
    %896 = vmatpush.bf16.msra.mxu0 %v854
    %897 = vmatpush.bf16.msra.mxu0 %v853
    %898 = vmatmul.bf16.gmra.mxu0 %v744
    %v899 = vpop.f32.mrf.mxu0
    %v900 = vadd.f32 %v887, %v899
    %v901 = vpop.f32.mrf.mxu0
    %902 = vdwg.mxu0
    %v903 = vstv %s142
    %v904 = vmul.f32 %v140, %v903
    %v905 = vadd.f32 %v904, %v900
    %v906 = vstv %s143
    %v907 = vmul.f32 %v732, %v906
    %v908 = vadd.f32 %v905, %v907
    %909 = vst [vmem:[#allocation15] sm:$0xff] %v908
    %910 = vst [vmem:[#allocation16] sm:$0xff] %v732
    // Predicated region
    $region70: #{tpu_custom_call.1} parent=1 // pred_check
      _
    $region71: #{tpu_custom_call.1} parent=1 // pred_check_branch
      %912 = sbr.rel (0) target = $region73
    $region72: #{tpu_custom_call.1} parent=1 // pred_region
      %914 = vsyncadd [#allocation4], 0
      %s916 = sshll.u32 [#allocation15], 4
      %s917 = int_to_ptr.vmem [resolvable:$true] %s916
      %s918 = sshll.u32 %s10, 4
      %s919 = int_to_ptr.hbm [resolvable:$true] %s918
      %921 = dma.vmem_to_hbm [thread:$0]  %s917, 128, %s919, [#allocation4]
    $region73: #{tpu_custom_call.1} parent=1 // pred_fallthru
      _
    // Predicated region
    $region74: #{tpu_custom_call.1} parent=1 // pred_check
      _
    $region75: #{tpu_custom_call.1} parent=1 // pred_check_branch
      %923 = sbr.rel (0) target = $region77
    $region76: #{tpu_custom_call.1} parent=1 // pred_region
      %925 = vsyncadd [#allocation17], 0
      %s927 = sshll.u32 [#allocation16], 4
      %s928 = int_to_ptr.vmem [resolvable:$true] %s927
      %s929 = sshll.u32 %s11, 4
      %s930 = int_to_ptr.hbm [resolvable:$true] %s929
      %932 = dma.vmem_to_hbm [thread:$0]  %s928, 128, %s930, [#allocation17]
    $region77: #{tpu_custom_call.1} parent=1 // pred_fallthru
      _
    // Predicated region
    $region78: #{tpu_custom_call.1} parent=1 // pred_check
      _
    $region79: #{tpu_custom_call.1} parent=1 // pred_check_branch
      %934 = sbr.rel (0) target = $region81
    $region80: #{tpu_custom_call.1} parent=1 // pred_region
      %936 = dma.done [#allocation4], 128
    $region81: #{tpu_custom_call.1} parent=1 // pred_fallthru
      _
    // Predicated region
    $region82: #{tpu_custom_call.1} parent=1 // pred_check
      _
    $region83: #{tpu_custom_call.1} parent=1 // pred_check_branch
      %938 = sbr.rel (0) target = $region85
    $region84: #{tpu_custom_call.1} parent=1 // pred_region
      %940 = dma.done [#allocation17], 128
    $region85: #{tpu_custom_call.1} parent=1 // pred_fallthru
      _
    %941 = vsyncpa [#allocation3], 1
    %942 = vsyncpa [#allocation8], 1
    %943 = vsyncpa [#allocation11], 1
    %944 = vsyncpa [#allocation14], 1
    %945 = vsyncpa [#allocation4], 1
    %946 = vsyncpa [#allocation17], 1
    %947 = vsyncpa [#allocation5], 1

</llo_original>
